<compile_context>
chip_gen: v5e
topology: v5e:2x2
jax: 0.10.0
libtpu: 0.0.40
codegen_flags: <defaults>
</compile_context>

<pallas_src>
import jax
import jax.numpy as jnp
from jax.experimental import pallas as pl
from jax.experimental.pallas import tpu as pltpu


_VMEM_LIMIT = 32 * 1024 * 1024      # scoped VMEM ceiling; safe on v5e/v6e/v7x
_VMEM_BUDGET = 8 * 1024 * 1024      # budget for the double-buffered input blocks


def _round_up(x, m):
    return -(-x // m) * m


def _pick_edge_tile(n_edges, in_bytes_per_edge, max_tile):
    # all inputs are double-buffered by the pipeline; keep 2x the per-step
    # input bytes under the budget. Tile is a multiple of 128 so edges stay
    # lane-dense in the [1, TE] output store.
    te = _VMEM_BUDGET // (2 * max(1, in_bytes_per_edge))
    te = max(128, min(max_tile, (te // 128) * 128))
    return max(128, min(te, _round_up(n_edges, 128)))


def _compiler_params():
    return pltpu.CompilerParams(
        dimension_semantics=("parallel",),
        vmem_limit_bytes=_VMEM_LIMIT)


# ---------------- Pallas kernels (per-edge compute) ----------------

def _u_sub_v_norm_kernel(hs_ref, hd_ref, out_ref):
    # default path: score = h_src - h_dst ; out = ||score||_2 over the feature dim.
    a = hs_ref[...].astype(jnp.float32)                      # [TE, D]
    b = hd_ref[...].astype(jnp.float32)
    diff = a - b
    out_ref[...] = jnp.sqrt(jnp.sum(diff * diff, axis=1))[None, :]       # [1, TE]


def _neg_cosine_kernel(hs_ref, hd_ref, out_ref):
    # cosine path: score = -CosineSimilarity(dim=1, eps=1e-6)(h_src, h_dst)
    # dot / max(|a||b|, 1e-6) == dot * rsqrt(max(|a|^2|b|^2, 1e-12))  (EUP rsqrt)
    a = hs_ref[...].astype(jnp.float32)                      # [TE, D]
    b = hd_ref[...].astype(jnp.float32)
    dot = jnp.sum(a * b, axis=1)
    na2 = jnp.sum(a * a, axis=1)
    nb2 = jnp.sum(b * b, axis=1)
    out_ref[...] = (-(dot * jax.lax.rsqrt(jnp.maximum(na2 * nb2, 1e-12))))[None, :]


def _cross_attn_kernel(a_ref, b_ref, sa_ref, sb_ref, out_ref):
    # attn path: cross-attention over feature slot 2, then
    # score = final_src - final_dst ; out = ||score||_2 over the hidden dim.
    # a_ref/b_ref : slot-2 features per edge [TE, L, D]
    # sa_ref/sb_ref: precomputed per-node sum over L of slots 0+1, gathered per
    #                edge [TE, D] (hoisted out of the per-edge domain).
    a = a_ref[...].astype(jnp.float32)                       # [TE, L, D]
    b = b_ref[...].astype(jnp.float32)

    # pairwise squared distances via ||a||^2 + ||b||^2 - 2 a.b^T ; cross term on MXU
    ab = jnp.einsum('eld,emd->elm', a, b, preferred_element_type=jnp.float32)
    na2 = jnp.sum(a * a, axis=2)                             # [TE, L]
    nb2 = jnp.sum(b * b, axis=2)                             # [TE, L]
    sq = jnp.maximum(na2[:, :, None] + nb2[:, None, :] - 2.0 * ab, 0.0)
    attn = jnp.exp(-jnp.sqrt(sq))                            # [TE, L, L]

    # single fused mask multiply (mask_a outer mask_b)
    mask = ((jnp.sum(a, axis=2) != 0).astype(jnp.float32)[:, :, None] *
            (jnp.sum(b, axis=2) != 0).astype(jnp.float32)[:, None, :])
    attn = attn * mask

    row_sum = jnp.sum(attn, axis=2)                          # [TE, L]
    col_sum = jnp.sum(attn, axis=1)                          # [TE, L]
    denom = jnp.sum(row_sum, axis=1, keepdims=True)          # [TE, 1]
    # tiny clamp keeps padded (all-masked) edge lanes finite; a real edge with a
    # fully-zero slot-2 block is degenerate (0/0 -> NaN) in the torch module too.
    inv_denom = pl.reciprocal(jnp.maximum(denom, 1e-30), approx=True)   # EUP
    final_a = jnp.sum(a * (row_sum * inv_denom)[:, :, None], axis=1)    # [TE, D]
    final_b = jnp.sum(b * (col_sum * inv_denom)[:, :, None], axis=1)

    score = (sa_ref[...].astype(jnp.float32) + final_a) - \
            (sb_ref[...].astype(jnp.float32) + final_b)      # [TE, D]
    out_ref[...] = jnp.sqrt(jnp.sum(score * score, axis=1))[None, :]    # [1, TE]


# ---------------- pallas_call wrappers ----------------

def _call_rank2(kernel, hs, hd, te, flops_per_edge, transc_per_edge):
    e_pad, d = hs.shape
    g = e_pad // te
    cost = pl.CostEstimate(
        flops=int(flops_per_edge * e_pad),
        transcendentals=int(transc_per_edge * e_pad),
        bytes_accessed=int(2 * e_pad * d * hs.dtype.itemsize + e_pad * 4))
    return pl.pallas_call(
        kernel,
        out_shape=jax.ShapeDtypeStruct((g, te), jnp.float32),
        grid=(g,),
        in_specs=[pl.BlockSpec((te, d), lambda i: (i, 0)),
                  pl.BlockSpec((te, d), lambda i: (i, 0))],
        out_specs=pl.BlockSpec((1, te), lambda i: (i, 0)),
        compiler_params=_compiler_params(),
        cost_estimate=cost,
    )(hs, hd)


def _call_attn(a2, b2, sa, sb, te):
    e_pad, l, d = a2.shape
    g = e_pad // te
    cost = pl.CostEstimate(
        flops=int(e_pad * (2 * l * l * d + 12 * l * l + 6 * l * d + 6 * d)),
        transcendentals=int(e_pad * (l * l + 1)),
        bytes_accessed=int(2 * e_pad * (l * d * a2.dtype.itemsize + d * 4) + e_pad * 4))
    return pl.pallas_call(
        _cross_attn_kernel,
        out_shape=jax.ShapeDtypeStruct((g, te), jnp.float32),
        grid=(g,),
        in_specs=[pl.BlockSpec((te, l, d), lambda i: (i, 0, 0)),
                  pl.BlockSpec((te, l, d), lambda i: (i, 0, 0)),
                  pl.BlockSpec((te, d), lambda i: (i, 0)),
                  pl.BlockSpec((te, d), lambda i: (i, 0))],
        out_specs=pl.BlockSpec((1, te), lambda i: (i, 0)),
        compiler_params=_compiler_params(),
        cost_estimate=cost,
    )(a2, b2, sa, sb)


# ---------------- wrapper (graph bookkeeping / gather = glue) ----------------

def batch_hetero_dot_product_predictor(h, src_idx, dst_idx, attn=False, cosine=False):
    """JAX/Pallas equivalent of BatchHeteroDotProductPredictor.forward."""
    n_edges = int(src_idx.shape[0])
    if n_edges == 0:                    # graph.number_of_edges(etype) == 0
        return None

    # TODO(synk): the jnp.take gather below still round-trips the gathered edge
    # tensors through HBM; fusing the gather into the kernel (scalar-prefetched
    # src/dst indices + manual per-edge DMA) would cut HBM traffic further but
    # is left out to keep the lowering simple and portable.

    if attn:
        _, s, l, d = h.shape            # s == 3 feature slots
        # per-node (not per-edge) reduction of slots 0+1 over L, hoisted to XLA.
        h2 = h[:, 2]                                                 # [N, L, D]
        h01 = jnp.sum(h[:, 0].astype(jnp.float32) +
                      h[:, 1].astype(jnp.float32), axis=1)           # [N, D] f32
        per_edge_bytes = 2 * (l * d * h.dtype.itemsize + d * 4)
        te = _pick_edge_tile(n_edges, per_edge_bytes, max_tile=512)
        e_pad = _round_up(n_edges, te)
        pad = jnp.zeros((e_pad,), dtype=src_idx.dtype)
        src_p = pad.at[:n_edges].set(src_idx)                        # padded -> node 0
        dst_p = pad.at[:n_edges].set(dst_idx)
        a2 = jnp.take(h2, src_p, axis=0)                             # [E_pad, L, D]
        b2 = jnp.take(h2, dst_p, axis=0)
        sa = jnp.take(h01, src_p, axis=0)                            # [E_pad, D]
        sb = jnp.take(h01, dst_p, axis=0)
        out = _call_attn(a2, b2, sa, sb, te)
    else:
        # TODO(synk): default/cosine kernels assume rank-2 node features [N, D];
        # rank-4 inputs would produce [E, L, D] scores in the PyTorch module.
        _, d = h.shape
        te = _pick_edge_tile(n_edges, 2 * d * h.dtype.itemsize, max_tile=4096)
        e_pad = _round_up(n_edges, te)
        pad = jnp.zeros((e_pad,), dtype=src_idx.dtype)
        src_p = pad.at[:n_edges].set(src_idx)
        dst_p = pad.at[:n_edges].set(dst_idx)
        hs = jnp.take(h, src_p, axis=0)                              # [E_pad, D] row gather
        hd = jnp.take(h, dst_p, axis=0)
        if cosine:
            out = _call_rank2(_neg_cosine_kernel, hs, hd, te, 6 * d + 4, 1)
        else:
            out = _call_rank2(_u_sub_v_norm_kernel, hs, hd, te, 3 * d + 1, 1)

    return out.reshape(-1)[:n_edges]


# ---------------- pure-JAX references for verification ----------------

def _ref_default(h, s, d):
    diff = h[s] - h[d]
    return jnp.sqrt(jnp.sum(diff * diff, axis=1))


def _ref_cosine(h, s, d):
    a, b = h[s], h[d]
    dot = jnp.sum(a * b, axis=1)
    na = jnp.sqrt(jnp.sum(a * a, axis=1))
    nb = jnp.sqrt(jnp.sum(b * b, axis=1))
    return -(dot / jnp.maximum(na * nb, 1e-6))


def _ref_attn(h, s, d):
    hs, hd = h[s], h[d]
    a, b = hs[:, 2], hd[:, 2]
    attn = jnp.exp(-jnp.linalg.norm(a[:, :, None, :] - b[:, None, :, :], axis=3))
    mask_a = (a.sum(axis=2) != 0).astype(jnp.float32)
    mask_b = (b.sum(axis=2) != 0).astype(jnp.float32)
    attn = attn * mask_a[:, :, None] * mask_b[:, None, :]
    denom = attn.sum(axis=2).sum(axis=1)[:, None]
    a_w = attn.sum(axis=2) / denom
    b_w = attn.sum(axis=1) / denom
    final_a = (a * a_w[:, :, None]).sum(axis=1)
    final_b = (b * b_w[:, :, None]).sum(axis=1)
    final_src = hs[:, 0].sum(axis=1) + hs[:, 1].sum(axis=1) + final_a
    final_dst = hd[:, 0].sum(axis=1) + hd[:, 1].sum(axis=1) + final_b
    return jnp.linalg.norm(final_src - final_dst, axis=1)


if __name__ == "__main__":
    key = jax.random.PRNGKey(0)
    k1, k2, k3, k4 = jax.random.split(key, 4)

    N, E, D, L = 16, 8, 32, 8
    h2d = jax.random.normal(k1, (N, D), dtype=jnp.float32)            # default / cosine
    h4d = jax.random.normal(k2, (N, 3, L, D), dtype=jnp.float32)      # attn path
    src_idx = jax.random.randint(k3, (E,), 0, N)
    dst_idx = jax.random.randint(k4, (E,), 0, N)

    out_default = jax.block_until_ready(
        batch_hetero_dot_product_predictor(h2d, src_idx, dst_idx))
    out_cosine = jax.block_until_ready(
        batch_hetero_dot_product_predictor(h2d, src_idx, dst_idx, cosine=True))
    out_attn = jax.block_until_ready(
        batch_hetero_dot_product_predictor(h4d, src_idx, dst_idx, attn=True))

    assert out_default.shape == (E,) and out_cosine.shape == (E,) and out_attn.shape == (E,)
    assert jnp.allclose(out_default, _ref_default(h2d, src_idx, dst_idx), rtol=1e-4, atol=1e-4)
    assert jnp.allclose(out_cosine, _ref_cosine(h2d, src_idx, dst_idx), rtol=1e-4, atol=1e-4)
    # attn path uses the ||a||^2+||b||^2-2ab expansion + EUP approx reciprocal:
    # slightly relaxed tolerance vs the exact reference.
    assert jnp.allclose(out_attn, _ref_attn(h4d, src_idx, dst_idx), rtol=2e-3, atol=2e-3)

    print("KERNEL_OK")
</pallas_src>

<mosaic_0001>
module attributes {stable_mosaic.version = 11 : i64} {
  func.func @_u_sub_v_norm_kernel(%arg0: i32, %arg1: memref<128x32xf32, #tpu.memory_space<vmem>>, %arg2: memref<128x32xf32, #tpu.memory_space<vmem>>, %arg3: memref<1x128xf32, #tpu.memory_space<vmem>>) attributes {dimension_semantics = [#tpu.dimension_semantics<parallel>], iteration_bounds = array<i64: 1>, scalar_prefetch = 0 : i64, scratch_operands = 0 : i64, tpu.core_type = #tpu.core_type<tc>, window_params = [{transform_indices = @transform_0, window_bounds = array<i64: 128, 32>}, {transform_indices = @transform_1, window_bounds = array<i64: 128, 32>}, {transform_indices = @transform_2, window_bounds = array<i64: 1, 128>}]} {
    %c0 = arith.constant 0 : index
    %c0_0 = arith.constant 0 : index
    %0 = vector.load %arg1[%c0, %c0_0] : memref<128x32xf32, #tpu.memory_space<vmem>>, vector<128x32xf32>
    %c0_1 = arith.constant 0 : index
    %c0_2 = arith.constant 0 : index
    %1 = vector.load %arg2[%c0_1, %c0_2] : memref<128x32xf32, #tpu.memory_space<vmem>>, vector<128x32xf32>
    %2 = arith.subf %0, %1 : vector<128x32xf32>
    %3 = arith.mulf %2, %2 : vector<128x32xf32>
    %cst = arith.constant dense<0.000000e+00> : vector<128xf32>
    %4 = vector.multi_reduction <add>, %3, %cst [1] : vector<128x32xf32> to vector<128xf32>
    %5 = math.sqrt %4 : vector<128xf32>
    %6 = vector.shape_cast %5 : vector<128xf32> to vector<1x128xf32>
    %c0_3 = arith.constant 0 : index
    %c0_4 = arith.constant 0 : index
    %7 = vector.load %arg3[%c0_3, %c0_4] : memref<1x128xf32, #tpu.memory_space<vmem>>, vector<1x128xf32>
    tpu.vector_store %arg3[%c0_3, %c0_4], %6 {strides = array<i32>} : memref<1x128xf32, #tpu.memory_space<vmem>>, vector<1x128xf32>,
    return
  }
  func.func @transform_0(%arg0: i32) -> (i32, i32) {
    %c0_i32 = arith.constant 0 : i32
    %c0_i32_0 = arith.constant 0 : i32
    return %arg0, %c0_i32 : i32, i32
  }
  func.func @transform_1(%arg0: i32) -> (i32, i32) {
    %c0_i32 = arith.constant 0 : i32
    %c0_i32_0 = arith.constant 0 : i32
    return %arg0, %c0_i32 : i32, i32
  }
  func.func @transform_2(%arg0: i32) -> (i32, i32) {
    %c0_i32 = arith.constant 0 : i32
    %c0_i32_0 = arith.constant 0 : i32
    return %arg0, %c0_i32 : i32, i32
  }
}

</mosaic_0001>

<llo_original>
// kernel: tpu_custom_call.1
$region0: #{tpu_custom_call.1}
  #allocation0 [shape = 'u32[]', space=smem, size = 0x4, offset = 0x4, fixed_abs, tag = 'smem constant byte address 0x4 - core index']
  #allocation1 [shape = 'u32[72,128]{1,0:T(1,128)}', space=vmem, size = 0x9000, scoped, tag = 'internal scratch']
  %s0 = inlined_call_operand.vmem [shape: f32[128,32], index: 0, kind: input, shape index: {}]
  %s1 = inlined_call_operand.vmem [shape: f32[128,32], index: 1, kind: input, shape index: {}]
  %s2 = inlined_call_operand.hbm [shape: f32[1,128], index: 2, kind: output, shape index: {}]
  %s3 = sld [smem:[#allocation0]]
  $region18: #{tpu_custom_call.1} parent=0
    _
  %s5 = ssub.s32 1, %s3
  %s6 = scalar_select 0, %s5, %s3
  $region1: #{tpu_custom_call.1} parent=0
    #allocation2 [shape = 'u8[512]{0}', space=vmem, size = 0x400, scoped, tag = 'output window, operand 0, single buffered']
    #allocation3 [shape = 's32[1]{0}', space=sflag, size = 0x4, scoped, tag = 'scoped memory for tpu_custom_call.1']
    %7 = vsyncpa [#allocation3], 0
    // Predicated region
    $region2: #{tpu_custom_call.1} parent=1 // pred_check
      _
    $region3: #{tpu_custom_call.1} parent=1 // pred_check_branch
      %9 = sbr.rel (0) target = $region5
    $region4: #{tpu_custom_call.1} parent=1 // pred_region
      _
    $region5: #{tpu_custom_call.1} parent=1 // pred_fallthru
      _
    // Predicated region
    $region6: #{tpu_custom_call.1} parent=1 // pred_check
      _
    $region7: #{tpu_custom_call.1} parent=1 // pred_check_branch
      %11 = sbr.rel (0) target = $region9
    $region8: #{tpu_custom_call.1} parent=1 // pred_region
      _
    $region9: #{tpu_custom_call.1} parent=1 // pred_fallthru
      _
    %v12 = vld [vmem:[%s0] sm:$0xff]
    %v13 = vld [vmem:[%s0 + $0x8] sm:$0xff]
    %v14 = vld [vmem:[%s0 + $0x10] sm:$0xff]
    %v15 = vld [vmem:[%s0 + $0x18] sm:$0xff]
    %v16 = vld [vmem:[%s0 + $0x20] sm:$0xff]
    %v17 = vld [vmem:[%s0 + $0x28] sm:$0xff]
    %v18 = vld [vmem:[%s0 + $0x30] sm:$0xff]
    %v19 = vld [vmem:[%s0 + $0x38] sm:$0xff]
    %v20 = vld [vmem:[%s0 + $0x40] sm:$0xff]
    %v21 = vld [vmem:[%s0 + $0x48] sm:$0xff]
    %v22 = vld [vmem:[%s0 + $0x50] sm:$0xff]
    %v23 = vld [vmem:[%s0 + $0x58] sm:$0xff]
    %v24 = vld [vmem:[%s0 + $0x60] sm:$0xff]
    %v25 = vld [vmem:[%s0 + $0x68] sm:$0xff]
    %v26 = vld [vmem:[%s0 + $0x70] sm:$0xff]
    %v27 = vld [vmem:[%s0 + $0x78] sm:$0xff]
    %v28 = vld [vmem:[%s1] sm:$0xff]
    %v29 = vld [vmem:[%s1 + $0x8] sm:$0xff]
    %v30 = vld [vmem:[%s1 + $0x10] sm:$0xff]
    %v31 = vld [vmem:[%s1 + $0x18] sm:$0xff]
    %v32 = vld [vmem:[%s1 + $0x20] sm:$0xff]
    %v33 = vld [vmem:[%s1 + $0x28] sm:$0xff]
    %v34 = vld [vmem:[%s1 + $0x30] sm:$0xff]
    %v35 = vld [vmem:[%s1 + $0x38] sm:$0xff]
    %v36 = vld [vmem:[%s1 + $0x40] sm:$0xff]
    %v37 = vld [vmem:[%s1 + $0x48] sm:$0xff]
    %v38 = vld [vmem:[%s1 + $0x50] sm:$0xff]
    %v39 = vld [vmem:[%s1 + $0x58] sm:$0xff]
    %v40 = vld [vmem:[%s1 + $0x60] sm:$0xff]
    %v41 = vld [vmem:[%s1 + $0x68] sm:$0xff]
    %v42 = vld [vmem:[%s1 + $0x70] sm:$0xff]
    %v43 = vld [vmem:[%s1 + $0x78] sm:$0xff]
    %v44 = vsub.f32 %v12, %v28
    %v45 = vsub.f32 %v13, %v29
    %v46 = vsub.f32 %v14, %v30
    %v47 = vsub.f32 %v15, %v31
    %v48 = vsub.f32 %v16, %v32
    %v49 = vsub.f32 %v17, %v33
    %v50 = vsub.f32 %v18, %v34
    %v51 = vsub.f32 %v19, %v35
    %v52 = vsub.f32 %v20, %v36
    %v53 = vsub.f32 %v21, %v37
    %v54 = vsub.f32 %v22, %v38
    %v55 = vsub.f32 %v23, %v39
    %v56 = vsub.f32 %v24, %v40
    %v57 = vsub.f32 %v25, %v41
    %v58 = vsub.f32 %v26, %v42
    %v59 = vsub.f32 %v27, %v43
    %v60 = vmul.f32 %v44, %v44
    %v61 = vmul.f32 %v45, %v45
    %v62 = vmul.f32 %v46, %v46
    %v63 = vmul.f32 %v47, %v47
    %v64 = vmul.f32 %v48, %v48
    %v65 = vmul.f32 %v49, %v49
    %v66 = vmul.f32 %v50, %v50
    %v67 = vmul.f32 %v51, %v51
    %v68 = vmul.f32 %v52, %v52
    %v69 = vmul.f32 %v53, %v53
    %v70 = vmul.f32 %v54, %v54
    %v71 = vmul.f32 %v55, %v55
    %v72 = vmul.f32 %v56, %v56
    %v73 = vmul.f32 %v57, %v57
    %v74 = vmul.f32 %v58, %v58
    %v75 = vmul.f32 %v59, %v59
    %vm76 = vcmask 261120
    %v77 = vsel %vm76, %v60, 0.0
    %78 = vadd.xlane.f32.xlu0 %v77
    %v79 = vpop.xlane.xlu0 %78
    %v80 = vsel %vm76, %v61, 0.0
    %81 = vadd.xlane.f32.xlu0 %v80
    %v82 = vpop.xlane.xlu0 %81
    %v83 = vsel %vm76, %v62, 0.0
    %84 = vadd.xlane.f32.xlu0 %v83
    %v85 = vpop.xlane.xlu0 %84
    %v86 = vsel %vm76, %v63, 0.0
    %87 = vadd.xlane.f32.xlu0 %v86
    %v88 = vpop.xlane.xlu0 %87
    %v89 = vsel %vm76, %v64, 0.0
    %90 = vadd.xlane.f32.xlu0 %v89
    %v91 = vpop.xlane.xlu0 %90
    %v92 = vsel %vm76, %v65, 0.0
    %93 = vadd.xlane.f32.xlu0 %v92
    %v94 = vpop.xlane.xlu0 %93
    %v95 = vsel %vm76, %v66, 0.0
    %96 = vadd.xlane.f32.xlu0 %v95
    %v97 = vpop.xlane.xlu0 %96
    %v98 = vsel %vm76, %v67, 0.0
    %99 = vadd.xlane.f32.xlu0 %v98
    %v100 = vpop.xlane.xlu0 %99
    %v101 = vsel %vm76, %v68, 0.0
    %102 = vadd.xlane.f32.xlu0 %v101
    %v103 = vpop.xlane.xlu0 %102
    %v104 = vsel %vm76, %v69, 0.0
    %105 = vadd.xlane.f32.xlu0 %v104
    %v106 = vpop.xlane.xlu0 %105
    %v107 = vsel %vm76, %v70, 0.0
    %108 = vadd.xlane.f32.xlu0 %v107
    %v109 = vpop.xlane.xlu0 %108
    %v110 = vsel %vm76, %v71, 0.0
    %111 = vadd.xlane.f32.xlu0 %v110
    %v112 = vpop.xlane.xlu0 %111
    %v113 = vsel %vm76, %v72, 0.0
    %114 = vadd.xlane.f32.xlu0 %v113
    %v115 = vpop.xlane.xlu0 %114
    %v116 = vsel %vm76, %v73, 0.0
    %117 = vadd.xlane.f32.xlu0 %v116
    %v118 = vpop.xlane.xlu0 %117
    %v119 = vsel %vm76, %v74, 0.0
    %120 = vadd.xlane.f32.xlu0 %v119
    %v121 = vpop.xlane.xlu0 %120
    %v122 = vsel %vm76, %v75, 0.0
    %123 = vadd.xlane.f32.xlu0 %v122
    %v124 = vpop.xlane.xlu0 %123
    %v125 = vrsqrt.pop %v79
    %v126 = vmul.f32 %v125, %v79
    %v127 = vmul.f32 %v126, %v125
    %v128 = vmul.f32 0.5, %v127
    %v129 = vsub.f32 1.5, %v128
    %v130 = vmul.f32 %v125, %v129
    %v131 = vmul.f32 %v79, %v130
    %vm132 = vcmp.eq.f32.partialorder %v79, inf
    %v133 = vsel %vm132, %v79, %v131
    %vm134 = vcmp.eq.f32.partialorder %v79, 0.0
    %v135 = vand.u32 %v79, 2147483648
    %v136 = vsel %vm134, %v135, %v133
    %v137 = vrsqrt.pop %v82
    %v138 = vmul.f32 %v137, %v82
    %v139 = vmul.f32 %v138, %v137
    %v140 = vmul.f32 0.5, %v139
    %v141 = vsub.f32 1.5, %v140
    %v142 = vmul.f32 %v137, %v141
    %v143 = vmul.f32 %v82, %v142
    %vm144 = vcmp.eq.f32.partialorder %v82, inf
    %v145 = vsel %vm144, %v82, %v143
    %vm146 = vcmp.eq.f32.partialorder %v82, 0.0
    %v147 = vand.u32 %v82, 2147483648
    %v148 = vsel %vm146, %v147, %v145
    %v149 = vrsqrt.pop %v85
    %v150 = vmul.f32 %v149, %v85
    %v151 = vmul.f32 %v150, %v149
    %v152 = vmul.f32 0.5, %v151
    %v153 = vsub.f32 1.5, %v152
    %v154 = vmul.f32 %v149, %v153
    %v155 = vmul.f32 %v85, %v154
    %vm156 = vcmp.eq.f32.partialorder %v85, inf
    %v157 = vsel %vm156, %v85, %v155
    %vm158 = vcmp.eq.f32.partialorder %v85, 0.0
    %v159 = vand.u32 %v85, 2147483648
    %v160 = vsel %vm158, %v159, %v157
    %v161 = vrsqrt.pop %v88
    %v162 = vmul.f32 %v161, %v88
    %v163 = vmul.f32 %v162, %v161
    %v164 = vmul.f32 0.5, %v163
    %v165 = vsub.f32 1.5, %v164
    %v166 = vmul.f32 %v161, %v165
    %v167 = vmul.f32 %v88, %v166
    %vm168 = vcmp.eq.f32.partialorder %v88, inf
    %v169 = vsel %vm168, %v88, %v167
    %vm170 = vcmp.eq.f32.partialorder %v88, 0.0
    %v171 = vand.u32 %v88, 2147483648
    %v172 = vsel %vm170, %v171, %v169
    %v173 = vrsqrt.pop %v91
    %v174 = vmul.f32 %v173, %v91
    %v175 = vmul.f32 %v174, %v173
    %v176 = vmul.f32 0.5, %v175
    %v177 = vsub.f32 1.5, %v176
    %v178 = vmul.f32 %v173, %v177
    %v179 = vmul.f32 %v91, %v178
    %vm180 = vcmp.eq.f32.partialorder %v91, inf
    %v181 = vsel %vm180, %v91, %v179
    %vm182 = vcmp.eq.f32.partialorder %v91, 0.0
    %v183 = vand.u32 %v91, 2147483648
    %v184 = vsel %vm182, %v183, %v181
    %v185 = vrsqrt.pop %v94
    %v186 = vmul.f32 %v185, %v94
    %v187 = vmul.f32 %v186, %v185
    %v188 = vmul.f32 0.5, %v187
    %v189 = vsub.f32 1.5, %v188
    %v190 = vmul.f32 %v185, %v189
    %v191 = vmul.f32 %v94, %v190
    %vm192 = vcmp.eq.f32.partialorder %v94, inf
    %v193 = vsel %vm192, %v94, %v191
    %vm194 = vcmp.eq.f32.partialorder %v94, 0.0
    %v195 = vand.u32 %v94, 2147483648
    %v196 = vsel %vm194, %v195, %v193
    %v197 = vrsqrt.pop %v97
    %v198 = vmul.f32 %v197, %v97
    %v199 = vmul.f32 %v198, %v197
    %v200 = vmul.f32 0.5, %v199
    %v201 = vsub.f32 1.5, %v200
    %v202 = vmul.f32 %v197, %v201
    %v203 = vmul.f32 %v97, %v202
    %vm204 = vcmp.eq.f32.partialorder %v97, inf
    %v205 = vsel %vm204, %v97, %v203
    %vm206 = vcmp.eq.f32.partialorder %v97, 0.0
    %v207 = vand.u32 %v97, 2147483648
    %v208 = vsel %vm206, %v207, %v205
    %v209 = vrsqrt.pop %v100
    %v210 = vmul.f32 %v209, %v100
    %v211 = vmul.f32 %v210, %v209
    %v212 = vmul.f32 0.5, %v211
    %v213 = vsub.f32 1.5, %v212
    %v214 = vmul.f32 %v209, %v213
    %v215 = vmul.f32 %v100, %v214
    %vm216 = vcmp.eq.f32.partialorder %v100, inf
    %v217 = vsel %vm216, %v100, %v215
    %vm218 = vcmp.eq.f32.partialorder %v100, 0.0
    %v219 = vand.u32 %v100, 2147483648
    %v220 = vsel %vm218, %v219, %v217
    %v221 = vrsqrt.pop %v103
    %v222 = vmul.f32 %v221, %v103
    %v223 = vmul.f32 %v222, %v221
    %v224 = vmul.f32 0.5, %v223
    %v225 = vsub.f32 1.5, %v224
    %v226 = vmul.f32 %v221, %v225
    %v227 = vmul.f32 %v103, %v226
    %vm228 = vcmp.eq.f32.partialorder %v103, inf
    %v229 = vsel %vm228, %v103, %v227
    %vm230 = vcmp.eq.f32.partialorder %v103, 0.0
    %v231 = vand.u32 %v103, 2147483648
    %v232 = vsel %vm230, %v231, %v229
    %v233 = vrsqrt.pop %v106
    %v234 = vmul.f32 %v233, %v106
    %v235 = vmul.f32 %v234, %v233
    %v236 = vmul.f32 0.5, %v235
    %v237 = vsub.f32 1.5, %v236
    %v238 = vmul.f32 %v233, %v237
    %v239 = vmul.f32 %v106, %v238
    %vm240 = vcmp.eq.f32.partialorder %v106, inf
    %v241 = vsel %vm240, %v106, %v239
    %vm242 = vcmp.eq.f32.partialorder %v106, 0.0
    %v243 = vand.u32 %v106, 2147483648
    %v244 = vsel %vm242, %v243, %v241
    %v245 = vrsqrt.pop %v109
    %v246 = vmul.f32 %v245, %v109
    %v247 = vmul.f32 %v246, %v245
    %v248 = vmul.f32 0.5, %v247
    %v249 = vsub.f32 1.5, %v248
    %v250 = vmul.f32 %v245, %v249
    %v251 = vmul.f32 %v109, %v250
    %vm252 = vcmp.eq.f32.partialorder %v109, inf
    %v253 = vsel %vm252, %v109, %v251
    %vm254 = vcmp.eq.f32.partialorder %v109, 0.0
    %v255 = vand.u32 %v109, 2147483648
    %v256 = vsel %vm254, %v255, %v253
    %v257 = vrsqrt.pop %v112
    %v258 = vmul.f32 %v257, %v112
    %v259 = vmul.f32 %v258, %v257
    %v260 = vmul.f32 0.5, %v259
    %v261 = vsub.f32 1.5, %v260
    %v262 = vmul.f32 %v257, %v261
    %v263 = vmul.f32 %v112, %v262
    %vm264 = vcmp.eq.f32.partialorder %v112, inf
    %v265 = vsel %vm264, %v112, %v263
    %vm266 = vcmp.eq.f32.partialorder %v112, 0.0
    %v267 = vand.u32 %v112, 2147483648
    %v268 = vsel %vm266, %v267, %v265
    %v269 = vrsqrt.pop %v115
    %v270 = vmul.f32 %v269, %v115
    %v271 = vmul.f32 %v270, %v269
    %v272 = vmul.f32 0.5, %v271
    %v273 = vsub.f32 1.5, %v272
    %v274 = vmul.f32 %v269, %v273
    %v275 = vmul.f32 %v115, %v274
    %vm276 = vcmp.eq.f32.partialorder %v115, inf
    %v277 = vsel %vm276, %v115, %v275
    %vm278 = vcmp.eq.f32.partialorder %v115, 0.0
    %v279 = vand.u32 %v115, 2147483648
    %v280 = vsel %vm278, %v279, %v277
    %v281 = vrsqrt.pop %v118
    %v282 = vmul.f32 %v281, %v118
    %v283 = vmul.f32 %v282, %v281
    %v284 = vmul.f32 0.5, %v283
    %v285 = vsub.f32 1.5, %v284
    %v286 = vmul.f32 %v281, %v285
    %v287 = vmul.f32 %v118, %v286
    %vm288 = vcmp.eq.f32.partialorder %v118, inf
    %v289 = vsel %vm288, %v118, %v287
    %vm290 = vcmp.eq.f32.partialorder %v118, 0.0
    %v291 = vand.u32 %v118, 2147483648
    %v292 = vsel %vm290, %v291, %v289
    %v293 = vrsqrt.pop %v121
    %v294 = vmul.f32 %v293, %v121
    %v295 = vmul.f32 %v294, %v293
    %v296 = vmul.f32 0.5, %v295
    %v297 = vsub.f32 1.5, %v296
    %v298 = vmul.f32 %v293, %v297
    %v299 = vmul.f32 %v121, %v298
    %vm300 = vcmp.eq.f32.partialorder %v121, inf
    %v301 = vsel %vm300, %v121, %v299
    %vm302 = vcmp.eq.f32.partialorder %v121, 0.0
    %v303 = vand.u32 %v121, 2147483648
    %v304 = vsel %vm302, %v303, %v301
    %v305 = vrsqrt.pop %v124
    %v306 = vmul.f32 %v305, %v124
    %v307 = vmul.f32 %v306, %v305
    %v308 = vmul.f32 0.5, %v307
    %v309 = vsub.f32 1.5, %v308
    %v310 = vmul.f32 %v305, %v309
    %v311 = vmul.f32 %v124, %v310
    %vm312 = vcmp.eq.f32.partialorder %v124, inf
    %v313 = vsel %vm312, %v124, %v311
    %vm314 = vcmp.eq.f32.partialorder %v124, 0.0
    %v315 = vand.u32 %v124, 2147483648
    %v316 = vsel %vm314, %v315, %v313
    %v333 = vlaneseq
    %v334 = vand.u32 %v333, 127
    %v335 = vperm.slane %v136, %v334
    %v336 = vadd.s32 %v334, 4294967288
    %v337 = vperm.slane %v148, %v336
    %vm338 = vcmask 130112
    %v339 = vsel %vm338, %v337, %v335
    %v340 = vadd.s32 %v334, 4294967280
    %v341 = vperm.slane %v160, %v340
    %vm342 = vcmask 195712
    %v343 = vsel %vm342, %v341, %v339
    %v344 = vadd.s32 %v334, 4294967272
    %v345 = vperm.slane %v172, %v344
    %vm346 = vcmask 261312
    %v347 = vsel %vm346, %v345, %v343
    %v348 = vadd.s32 %v334, 4294967264
    %v349 = vperm.slane %v184, %v348
    %vm350 = vcmask 326912
    %v351 = vsel %vm350, %v349, %v347
    %v352 = vadd.s32 %v334, 4294967256
    %v353 = vperm.slane %v196, %v352
    %vm354 = vcmask 392512
    %v355 = vsel %vm354, %v353, %v351
    %v356 = vadd.s32 %v334, 4294967248
    %v357 = vperm.slane %v208, %v356
    %vm358 = vcmask 458112
    %v359 = vsel %vm358, %v357, %v355
    %v360 = vadd.s32 %v334, 4294967240
    %v361 = vperm.slane %v220, %v360
    %vm362 = vcmask 523712
    %v363 = vsel %vm362, %v361, %v359
    %v364 = vadd.s32 %v334, 4294967232
    %v365 = vperm.slane %v232, %v364
    %vm366 = vcmask 589312
    %v367 = vsel %vm366, %v365, %v363
    %v368 = vadd.s32 %v334, 4294967224
    %v369 = vperm.slane %v244, %v368
    %vm370 = vcmask 654912
    %v371 = vsel %vm370, %v369, %v367
    %v372 = vadd.s32 %v334, 4294967216
    %v373 = vperm.slane %v256, %v372
    %vm374 = vcmask 720512
    %v375 = vsel %vm374, %v373, %v371
    %v376 = vadd.s32 %v334, 4294967208
    %v377 = vperm.slane %v268, %v376
    %vm378 = vcmask 786112
    %v379 = vsel %vm378, %v377, %v375
    %v380 = vadd.s32 %v334, 4294967200
    %v381 = vperm.slane %v280, %v380
    %vm382 = vcmask 851712
    %v383 = vsel %vm382, %v381, %v379
    %v384 = vadd.s32 %v334, 4294967192
    %v385 = vperm.slane %v292, %v384
    %vm386 = vcmask 917312
    %v387 = vsel %vm386, %v385, %v383
    %v388 = vadd.s32 %v334, 4294967184
    %v389 = vperm.slane %v304, %v388
    %vm390 = vcmask 982912
    %v391 = vsel %vm390, %v389, %v387
    %v392 = vadd.s32 %v334, 4294967176
    %v393 = vperm.slane %v316, %v392
    %vm394 = vcmask 1048512
    %v395 = vsel %vm394, %v393, %v391
    %397 = vst [vmem:[#allocation2] sm:$0x1] %v395
    // Predicated region
    $region10: #{tpu_custom_call.1} parent=1 // pred_check
      _
    $region11: #{tpu_custom_call.1} parent=1 // pred_check_branch
      %399 = sbr.rel (0) target = $region13
    $region12: #{tpu_custom_call.1} parent=1 // pred_region
      %401 = vsyncadd [#allocation3], 0
      %s403 = sshll.u32 [#allocation2], 4
      %s404 = int_to_ptr.vmem [resolvable:$true] %s403
      %s405 = sshll.u32 %s2, 4
      %s406 = int_to_ptr.hbm [resolvable:$true] %s405
      %408 = dma.vmem_to_hbm [thread:$0]  %s404, 16, %s406, [#allocation3]
    $region13: #{tpu_custom_call.1} parent=1 // pred_fallthru
      _
    // Predicated region
    $region14: #{tpu_custom_call.1} parent=1 // pred_check
      _
    $region15: #{tpu_custom_call.1} parent=1 // pred_check_branch
      %410 = sbr.rel (0) target = $region17
    $region16: #{tpu_custom_call.1} parent=1 // pred_region
      %412 = dma.done [#allocation3], 16
    $region17: #{tpu_custom_call.1} parent=1 // pred_fallthru
      _
    %413 = vsyncpa [#allocation3], 1

</llo_original>
